<compile_context>
chip_gen: v6e
topology: v6e:2x2x1
jax: 0.10.0
libtpu: 0.0.40
codegen_flags: <defaults>
</compile_context>

<pallas_src>
import math
import functools

import jax
import jax.numpy as jnp
from jax import lax
from jax.experimental import pallas as pl
from jax.experimental.pallas import tpu as pltpu


# --------------------------------------------------------------------------- kernels
def kv_projection_kernel(x_ref, w_ref, b_ref, kv_ref):
    """One fused x @ [Wk*scale | Wv] matmul per row tile -> one wide bf16 store."""
    x = x_ref[...].astype(jnp.bfloat16)
    h = jnp.dot(x, w_ref[...], preferred_element_type=jnp.float32) + b_ref[...]
    kv_ref[...] = h.astype(kv_ref.dtype)


def attention_kernel(d_model, has_pad, split_output_matmul,
                     x_ref, k_ref, v_ref, mask_ref, wq_ref, bq_ref,
                     wvq_ref, b3_ref, o_ref):
    D = d_model

    # Q projection fused here (no HBM round trip for Q).
    x = x_ref[...].astype(jnp.bfloat16)                                   # (TQ, D)
    q = (jnp.dot(x, wq_ref[...], preferred_element_type=jnp.float32)
         + bq_ref[...]).astype(jnp.bfloat16)                              # (TQ, D)

    # scores = (Q K^T) / sqrt(D); scale pre-folded into K.  Contract the shared
    # last dim directly so no K transpose/relayout is materialized.
    scores = lax.dot_general(q, k_ref[...],
                             dimension_numbers=(((1,), (1,)), ((), ())),
                             preferred_element_type=jnp.float32)          # (TQ, Npad)
    if has_pad:  # static: single broadcast add, mask is 0 / -1e30 per key column
        scores = scores + mask_ref[...]

    # softmax over keys (== torch.softmax(scores, dim=1) for the 2-D [N, N] scores)
    m = jnp.max(scores, axis=-1, keepdims=True)
    e = jnp.exp(scores - m)
    denom = jnp.sum(e, axis=-1, keepdims=True)
    alpha = (e * pl.reciprocal(denom, approx=True)).astype(jnp.bfloat16)

    v_ = jnp.dot(alpha, v_ref[...],
                 preferred_element_type=jnp.float32).astype(jnp.bfloat16)  # (TQ, D)

    # x_cat = [V_ | Q]; Linear(2D->D) and aoa Linear(2D->2D)+GLU share one packed
    # [2D, 3D] weight.  Fused K=2D contraction for v6e/v7x; split K=D dots for v5e.
    if split_output_matmul:
        w = wvq_ref[...]
        h = (jnp.dot(v_, w[:D], preferred_element_type=jnp.float32)
             + jnp.dot(q, w[D:], preferred_element_type=jnp.float32)
             + b3_ref[...])                                                # (TQ, 3D)
    else:
        x_cat = jnp.concatenate([v_, q], axis=1)                           # (TQ, 2D)
        h = (jnp.dot(x_cat, wvq_ref[...], preferred_element_type=jnp.float32)
             + b3_ref[...])                                                # (TQ, 3D)

    x1 = h[:, :D]
    a_val = h[:, D:2 * D]
    a_gate = h[:, 2 * D:]
    o_ref[...] = (x1 * a_val * jax.nn.sigmoid(a_gate)).astype(o_ref.dtype)


# ----------------------------------------------------------------- params / packing
def init_params(key, d_model):
    """Deterministic synthetic params, matching nn.Linear's shapes/init style."""
    D = d_model

    def linear(k, in_f, out_f):
        kw, kb = jax.random.split(k)
        bound = 1.0 / math.sqrt(in_f)
        w = jax.random.uniform(kw, (out_f, in_f), jnp.float32, -bound, bound)
        b = jax.random.uniform(kb, (out_f,), jnp.float32, -bound, bound)
        return w, b

    kq, kk, kv, kl, ka = jax.random.split(key, 5)
    wq, bq = linear(kq, D, D)          # query
    wk, bk = linear(kk, D, D)          # key
    wv, bv = linear(kv, D, D)          # value
    wl, bl = linear(kl, 2 * D, D)      # linear
    wa, ba = linear(ka, 2 * D, 2 * D)  # aoa[0]
    return dict(wq=wq, bq=bq, wk=wk, bk=bk, wv=wv, bv=bv,
                wl=wl, bl=bl, wa=wa, ba=ba)


def pack_kernel_params(p, d_model):
    """Transpose to [in, out], fuse, fold the softmax scale into K, cast to bf16."""
    D = d_model
    scale = 1.0 / math.sqrt(D)
    bf, f32 = jnp.bfloat16, jnp.float32

    # Kernel 1: fused K|V projection, columns = [K*scale | V].
    w_kv = jnp.concatenate([p["wk"].T * scale, p["wv"].T], axis=1).astype(bf)  # [D, 2D]
    b_kv = jnp.concatenate([p["bk"] * scale, p["bv"]]).reshape(1, 2 * D).astype(f32)

    # Kernel 2: Q projection (fused into the attention kernel).
    w_q = p["wq"].T.astype(bf)                                                 # [D, D]
    b_q = p["bq"].reshape(1, D).astype(f32)

    # x_cat = [V_ | Q] (dim=1): Linear(2D->D) and aoa Linear(2D->2D) packed into one
    # [2D, 3D] weight; output columns = [linear | GLU value | GLU gate].
    w_vq = jnp.concatenate([p["wl"].T, p["wa"].T], axis=1).astype(bf)          # [2D, 3D]
    b3 = jnp.concatenate([p["bl"], p["ba"]]).reshape(1, 3 * D).astype(f32)
    return w_kv, b_kv, w_q, b_q, w_vq, b3


# ----------------------------------------------------------------------- entry point
def _round_up(n, m):
    return ((n + m - 1) // m) * m


def _vmem_limit(block_footprint_bytes):
    """Size the scoped-VMEM budget from the real footprint, capped by the chip."""
    try:
        phys = pltpu.get_tpu_info().vmem_capacity_bytes
    except Exception:
        phys = 64 * 1024 * 1024        # conservative fallback (v7x per-TC VMEM)
    cap = max(int(phys * 3 // 4), 32 * 1024 * 1024)
    return int(min(max(2 * block_footprint_bytes, 32 * 1024 * 1024), cap))


def intra_attention(x, params, *, tile_rows=512, split_output_matmul=False,
                    out_dtype=jnp.float32):
    N, D = x.shape
    assert D % 128 == 0, "d_model must be lane-dense (multiple of 128)"

    # Query-row tile: multiple of 128, as large as requested, but shrunk until the
    # row grid keeps >= 2 steps (megacore sharding on v7x + pipeline depth).
    tq = max(128, (tile_rows // 128) * 128)
    while tq > 128 and pl.cdiv(N, tq) < 2:
        tq -= 128
    n_pad = _round_up(N, tq)
    has_pad = n_pad != N

    xp = jnp.pad(x, ((0, n_pad - N), (0, 0))) if has_pad else x
    # Additive key mask row: 0 for valid keys, -1e30 for padded key columns.
    mask = jnp.where(jnp.arange(n_pad) < N, 0.0, -1e30
                     ).astype(jnp.float32).reshape(1, n_pad)

    w_kv, b_kv, w_q, b_q, w_vq, b3 = pack_kernel_params(params, D)

    grid = (n_pad // tq,)

    def resident(shape, index_map=lambda i: (0, 0)):
        # Constant block across the grid: fetched once, single-buffered (no 2x VMEM).
        return pl.BlockSpec(shape, index_map, pipeline_mode=pl.Buffered(1))

    bf2, f4 = 2, 4
    out_bytes = jnp.dtype(out_dtype).itemsize
    # Footprint estimates (double-buffered streaming blocks, single-buffered residents,
    # plus room for the in-kernel (TQ, Npad) score/exp temporaries); 2x margin applied
    # inside _vmem_limit.
    fp1 = (2 * tq * D * f4                # x tile
           + D * 2 * D * bf2              # W_kv
           + 8 * 2 * D * f4               # b_kv (sublane-padded)
           + 2 * tq * 2 * D * bf2)        # kv out tile
    fp2 = (2 * tq * D * f4                # x tile
           + 2 * n_pad * D * bf2          # K + V resident
           + 8 * n_pad * f4               # mask
           + D * D * bf2 + 8 * D * f4     # Wq, bq
           + 2 * D * 3 * D * bf2 + 8 * 3 * D * f4   # W_vq, b3
           + 2 * tq * D * out_bytes       # output tile
           + 3 * tq * n_pad * f4)         # scores / exp temporaries

    # ---- kernel 1: fused K|V projection, one wide lane-dense bf16 output ----
    kv = pl.pallas_call(
        kv_projection_kernel,
        out_shape=jax.ShapeDtypeStruct((n_pad, 2 * D), jnp.bfloat16),
        grid_spec=pltpu.PrefetchScalarGridSpec(
            num_scalar_prefetch=0,
            grid=grid,
            in_specs=[
                pl.BlockSpec((tq, D), lambda i: (i, 0)),   # x row tile (streamed)
                resident((D, 2 * D)),                      # W_kv
                resident((1, 2 * D)),                      # b_kv
            ],
            out_specs=pl.BlockSpec((tq, 2 * D), lambda i: (i, 0))),
        compiler_params=pltpu.CompilerParams(
            dimension_semantics=("parallel",),
            vmem_limit_bytes=_vmem_limit(fp1)),
    )(xp, w_kv, b_kv)

    # ---- kernel 2: Q projection + attention + gated output, tiled over query rows ----
    out = pl.pallas_call(
        functools.partial(attention_kernel, D, has_pad, split_output_matmul),
        out_shape=jax.ShapeDtypeStruct((n_pad, D), out_dtype),
        grid_spec=pltpu.PrefetchScalarGridSpec(
            num_scalar_prefetch=0,
            grid=grid,
            in_specs=[
                pl.BlockSpec((tq, D), lambda i: (i, 0)),   # x row tile (streamed)
                resident((n_pad, D)),                      # K  = kv[:, :D]
                resident((n_pad, D), lambda i: (0, 1)),    # V  = kv[:, D:]
                resident((1, n_pad)),                      # additive key mask
                resident((D, D)),                          # Wq
                resident((1, D)),                          # bq
                resident((2 * D, 3 * D)),                  # W_vq (linear|value|gate)
                resident((1, 3 * D)),                      # b3
            ],
            out_specs=pl.BlockSpec((tq, D), lambda i: (i, 0))),
        compiler_params=pltpu.CompilerParams(
            dimension_semantics=("parallel",),
            vmem_limit_bytes=_vmem_limit(fp2)),
    )(xp, kv, kv, mask, w_q, b_q, w_vq, b3)

    return out[:N]


# ------------------------------------------------------------------------- reference
def intra_attention_ref(x, p):
    """Pure-JAX f32 reference, transcribing the PyTorch forward 1:1."""
    D = x.shape[-1]
    q = x @ p["wq"].T + p["bq"]
    k = x @ p["wk"].T + p["bk"]
    v = x @ p["wv"].T + p["bv"]
    scores = (q @ k.T) / math.sqrt(D)
    alpha = jax.nn.softmax(scores, axis=1)        # torch.softmax(scores, dim=1)
    v_ = alpha @ v
    xc = jnp.concatenate([v_, q], axis=1)         # torch.cat([V_, Q], dim=1)
    x1 = xc @ p["wl"].T + p["bl"]
    a = xc @ p["wa"].T + p["ba"]
    alpha_ = a[:, :D] * jax.nn.sigmoid(a[:, D:])  # GLU(dim=-1)
    return x1 * alpha_


if __name__ == "__main__":
    # [seq, d_model]; d_model lane-dense (multiple of 128), seq deliberately NOT a
    # multiple of the row tile to exercise the padding + additive-key-mask path.
    N, D = 200, 128
    key = jax.random.PRNGKey(0)
    kx, kp = jax.random.split(key)
    x = jax.random.normal(kx, (N, D), dtype=jnp.float32)
    params = init_params(kp, D)

    out = jax.block_until_ready(intra_attention(x, params))
    ref = intra_attention_ref(x, params)

    assert out.shape == (N, D)
    # bf16 MXU operands (f32 accumulation) => relaxed tolerance vs the f32 reference.
    max_err = float(jnp.max(jnp.abs(out - ref)))
    assert jnp.allclose(out, ref, atol=3e-2, rtol=3e-2), (
        f"mismatch vs reference (max abs err {max_err})")
    print("KERNEL_OK")
</pallas_src>

<mosaic_0001>
module attributes {stable_mosaic.version = 11 : i64} {
  func.func @kv_projection_kernel(%arg0: i32, %arg1: memref<128x128xf32, #tpu.memory_space<vmem>>, %arg2: memref<128x256xbf16, #tpu.memory_space<vmem>>, %arg3: memref<1x256xf32, #tpu.memory_space<vmem>>, %arg4: memref<128x256xbf16, #tpu.memory_space<vmem>>) attributes {dimension_semantics = [#tpu.dimension_semantics<parallel>], iteration_bounds = array<i64: 2>, scalar_prefetch = 0 : i64, scratch_operands = 0 : i64, tpu.core_type = #tpu.core_type<tc>, window_params = [{transform_indices = @transform_0, window_bounds = array<i64: 128, 128>}, {pipeline_mode = #tpu.pipeline_mode<synchronous>, transform_indices = @transform_1, window_bounds = array<i64: 128, 256>}, {pipeline_mode = #tpu.pipeline_mode<synchronous>, transform_indices = @transform_2, window_bounds = array<i64: 1, 256>}, {transform_indices = @transform_3, window_bounds = array<i64: 128, 256>}]} {
    %c0 = arith.constant 0 : index
    %c0_0 = arith.constant 0 : index
    %0 = vector.load %arg1[%c0, %c0_0] : memref<128x128xf32, #tpu.memory_space<vmem>>, vector<128x128xf32>
    %1 = arith.truncf %0 : vector<128x128xf32> to vector<128x128xbf16>
    %c0_1 = arith.constant 0 : index
    %c0_2 = arith.constant 0 : index
    %2 = vector.load %arg2[%c0_1, %c0_2] : memref<128x256xbf16, #tpu.memory_space<vmem>>, vector<128x256xbf16>
    %cst = arith.constant dense<0.000000e+00> : vector<128x256xf32>
    %3 = tpu.matmul %1, %2, %cst {dimension_numbers = #tpu.dot_dimension_numbers<[1], [0], [0], [1], [0, 0, 1, 1], [], []>} : vector<128x128xbf16>, vector<128x256xbf16>, vector<128x256xf32> -> vector<128x256xf32>
    %c0_3 = arith.constant 0 : index
    %c0_4 = arith.constant 0 : index
    %4 = vector.load %arg3[%c0_3, %c0_4] : memref<1x256xf32, #tpu.memory_space<vmem>>, vector<1x256xf32>
    %5 = vector.broadcast %4 : vector<1x256xf32> to vector<128x256xf32>
    %6 = arith.addf %3, %5 : vector<128x256xf32>
    %7 = arith.truncf %6 : vector<128x256xf32> to vector<128x256xbf16>
    %c0_5 = arith.constant 0 : index
    %c0_6 = arith.constant 0 : index
    %8 = vector.load %arg4[%c0_5, %c0_6] : memref<128x256xbf16, #tpu.memory_space<vmem>>, vector<128x256xbf16>
    tpu.vector_store %arg4[%c0_5, %c0_6], %7 {strides = array<i32>} : memref<128x256xbf16, #tpu.memory_space<vmem>>, vector<128x256xbf16>,
    return
  }
  func.func @transform_0(%arg0: i32) -> (i32, i32) {
    %c0_i32 = arith.constant 0 : i32
    %c0_i32_0 = arith.constant 0 : i32
    return %arg0, %c0_i32 : i32, i32
  }
  func.func @transform_1(%arg0: i32) -> (i32, i32) {
    %c0_i32 = arith.constant 0 : i32
    %c0_i32_0 = arith.constant 0 : i32
    %c0_i32_1 = arith.constant 0 : i32
    return %c0_i32, %c0_i32_0 : i32, i32
  }
  func.func @transform_2(%arg0: i32) -> (i32, i32) {
    %c0_i32 = arith.constant 0 : i32
    %c0_i32_0 = arith.constant 0 : i32
    %c0_i32_1 = arith.constant 0 : i32
    return %c0_i32, %c0_i32_0 : i32, i32
  }
  func.func @transform_3(%arg0: i32) -> (i32, i32) {
    %c0_i32 = arith.constant 0 : i32
    %c0_i32_0 = arith.constant 0 : i32
    return %arg0, %c0_i32 : i32, i32
  }
}

</mosaic_0001>

<llo_original>
// kernel: tpu_custom_call.1
$region0: #{tpu_custom_call.1}
  #allocation0 [shape = 'u32[]', space=smem, size = 0x4, offset = 0x4, fixed_abs, tag = 'smem constant byte address 0x4 - core index']
  #allocation1 [shape = 'u32[144,128]{1,0:T(1,128)}', space=vmem, size = 0x12000, scoped, tag = 'internal scratch']
  %s0 = inlined_call_operand.hbm [shape: f32[256,128], index: 0, kind: input, shape index: {}]
  %s1 = inlined_call_operand.hbm [shape: bf16[128,256], index: 1, kind: input, shape index: {}]
  %s2 = inlined_call_operand.vmem [shape: f32[1,256], index: 2, kind: input, shape index: {}]
  %s3 = inlined_call_operand.hbm [shape: bf16[256,256], index: 3, kind: output, shape index: {}]
  %s4 = sld [smem:[#allocation0]]
  $region53: #{tpu_custom_call.1} parent=0
    _
  %s6 = ssub.s32 1, %s4
  %s7 = scalar_select 0, %s6, %s4
  $region1: #{tpu_custom_call.1} parent=0
    #allocation2 [shape = 'u8[131072]{0}', space=vmem, size = 0x20000, scoped, tag = 'input window, operand 0']
    #allocation3 [shape = 's32[2]{0}', space=sflag, size = 0x8, scoped, tag = 'scoped memory for tpu_custom_call.1']
    #allocation4 [shape = 's32[2]{0}', space=sflag, size = 0x8, scoped, tag = 'scoped memory for tpu_custom_call.1']
    #allocation5 [shape = 'u8[65536]{0}', space=vmem, size = 0x10000, scoped, tag = 'input window, operand 1, single buffered']
    #allocation6 [shape = 's32[1]{0}', space=sflag, size = 0x4, scoped, tag = 'scoped memory for tpu_custom_call.1']
    #allocation7 [shape = 'u8[131072]{0}', space=vmem, size = 0x20000, scoped, tag = 'output window, operand 0']
    %8 = vsyncpa [#allocation3], 0
    %s9 = scalar_lea.sflag [#allocation3], 1
    %10 = vsyncpa %s9, 0
    %11 = vsyncpa [#allocation6], 0
    %12 = vsyncpa [#allocation4], 0
    %s13 = scalar_lea.sflag [#allocation4], 1
    %14 = vsyncpa %s13, 0
    loop: start=0, step=1, limit=4
    $region2: #{tpu_custom_call.1} parent=1 // loop_pre_header
      _
    $region3: #{tpu_custom_call.1} parent=1 // loop_header
      %s16 = sphi 0, %s20
      %p17 = scmp.ge.s32.totalorder %s16, 4
      %s26 = sphi 0, %s28
      %s29 = sphi 0, %s26
      %s30 = sphi 0, %s29
      %s46 = sphi 0, %s30
      %s50 = sphi 0, %s50
      %s52 = sphi 0, %s50
      %s53 = sphi 0, %s52
      %s67 = sphi 0, %s53
      %s71 = sphi 0, %s71
      %s73 = sphi 0, %s71
      %s74 = sphi 0, %s73
      %s88 = sphi 0, %s74
      %s94 = sphi 0, %s96
      %s97 = sphi 0, %s94
      %s98 = sphi 0, %s97
      %s114 = sphi 0, %s98
    $region4: #{tpu_custom_call.1} parent=1 // loop_header_branch
      %19 = sbr.rel (%p17) target = $region8
    $region5: #{tpu_custom_call.1} parent=1 // loop_body
      %s21 = ssub.s32 %s16, 1
      %s22 = ssub.s32 %s16, 2
      %s23 = sadd.s32 %s16, 1
      %s24 = ssub.s32 %s16, %s23
      %p25 = scmp.eq.s32.totalorder %s24, 0
      %s27 = sadd.s32 %s26, 1
      %s28 = scalar_select %p25, %s26, %s27
      %p31 = pneg %p25
      %p32 = scmp.eq.s32.totalorder %s16, 1
      %p33 = por %p31, %p32
      %p34 = scmp.ne.s32.totalorder %s26, %s29
      %p35 = scmp.eq.s32.totalorder %s16, 0
      %p36 = por %p34, %p35
      %p37 = scmp.ne.s32.totalorder %s26, %s29
      %p38 = scmp.eq.s32.totalorder %s21, 1
      %p39 = por %p37, %p38
      %p40 = scmp.ne.s32.totalorder %s29, %s30
      %p41 = scmp.eq.s32.totalorder %s21, 0
      %p42 = por %p40, %p41
      %p43 = scmp.ne.s32.totalorder %s29, %s30
      %p44 = scmp.eq.s32.totalorder %s22, 1
      %p45 = por %p43, %p44
      %p47 = scmp.ne.s32.totalorder %s30, %s46
      %p48 = scmp.eq.s32.totalorder %s22, 0
      %p49 = por %p47, %p48
      %s51 = sadd.s32 %s50, 1
      %p54 = scmp.eq.s32.totalorder %s16, 1
      %p55 = scmp.ne.s32.totalorder %s50, %s52
      %p56 = scmp.eq.s32.totalorder %s16, 0
      %p57 = por %p55, %p56
      %p58 = scmp.ne.s32.totalorder %s50, %s52
      %p59 = scmp.eq.s32.totalorder %s21, 1
      %p60 = por %p58, %p59
      %p61 = scmp.ne.s32.totalorder %s52, %s53
      %p62 = scmp.eq.s32.totalorder %s21, 0
      %p63 = por %p61, %p62
      %p64 = scmp.ne.s32.totalorder %s52, %s53
      %p65 = scmp.eq.s32.totalorder %s22, 1
      %p66 = por %p64, %p65
      %p68 = scmp.ne.s32.totalorder %s53, %s67
      %p69 = scmp.eq.s32.totalorder %s22, 0
      %p70 = por %p68, %p69
      %s72 = sadd.s32 %s71, 1
      %p75 = scmp.eq.s32.totalorder %s16, 1
      %p76 = scmp.ne.s32.totalorder %s71, %s73
      %p77 = scmp.eq.s32.totalorder %s16, 0
      %p78 = por %p76, %p77
      %p79 = scmp.ne.s32.totalorder %s71, %s73
      %p80 = scmp.eq.s32.totalorder %s21, 1
      %p81 = por %p79, %p80
      %p82 = scmp.ne.s32.totalorder %s73, %s74
      %p83 = scmp.eq.s32.totalorder %s21, 0
      %p84 = por %p82, %p83
      %p85 = scmp.ne.s32.totalorder %s73, %s74
      %p86 = scmp.eq.s32.totalorder %s22, 1
      %p87 = por %p85, %p86
      %p89 = scmp.ne.s32.totalorder %s74, %s88
      %p90 = scmp.eq.s32.totalorder %s22, 0
      %p91 = por %p89, %p90
      %s92 = ssub.s32 %s16, %s23
      %p93 = scmp.eq.s32.totalorder %s92, 0
      %s95 = sadd.s32 %s94, 1
      %s96 = scalar_select %p93, %s94, %s95
      %p99 = pneg %p93
      %p100 = scmp.eq.s32.totalorder %s16, 1
      %p101 = por %p99, %p100
      %p102 = scmp.ne.s32.totalorder %s94, %s97
      %p103 = scmp.eq.s32.totalorder %s16, 0
      %p104 = por %p102, %p103
      %p105 = scmp.ne.s32.totalorder %s94, %s97
      %p106 = scmp.eq.s32.totalorder %s21, 1
      %p107 = por %p105, %p106
      %p108 = scmp.ne.s32.totalorder %s97, %s98
      %p109 = scmp.eq.s32.totalorder %s21, 0
      %p110 = por %p108, %p109
      %p111 = scmp.ne.s32.totalorder %s97, %s98
      %p112 = scmp.eq.s32.totalorder %s22, 1
      %p113 = por %p111, %p112
      %p115 = scmp.ne.s32.totalorder %s98, %s114
      %p116 = scmp.eq.s32.totalorder %s22, 0
      %p117 = por %p115, %p116
      %p118 = scmp.le.s32.totalorder 1, %s16
      %p119 = scmp.lt.s32.totalorder %s16, 3
      %p120 = pnand %p118, %p119
      %p121 = pneg %p120
      // Predicated region
      $region9: #{tpu_custom_call.1} parent=5 // pred_check
        _
      $region10: #{tpu_custom_call.1} parent=5 // pred_check_branch
        %123 = sbr.rel (%p120) target = $region12
      $region11: #{tpu_custom_call.1} parent=5 // pred_region
        %s124 = ssub.s32 %s16, 1
        // Predicated region
        $region13: #{tpu_custom_call.1} parent=11 // pred_check
          %p125 = pneg %p63
        $region14: #{tpu_custom_call.1} parent=11 // pred_check_branch
          %127 = sbr.rel (%p125) target = $region16
        $region15: #{tpu_custom_call.1} parent=11 // pred_region
          %s129 = ssub.s32 2048, 2048
          %130 = vsyncadd [#allocation6], %s129
          %s131 = sshll.u32 [#allocation5], 4
          %s132 = int_to_ptr.vmem [resolvable:$true] %s131
          %137 = dma.hbm_to_vmem [thread:$0]  %s1, 2048, %s132, [#allocation6], 128, 128, 8
        $region16: #{tpu_custom_call.1} parent=11 // pred_fallthru
          _
        // Predicated region
        $region17: #{tpu_custom_call.1} parent=11 // pred_check
          %p138 = pneg %p84
        $region18: #{tpu_custom_call.1} parent=11 // pred_check_branch
          %140 = sbr.rel (%p138) target = $region20
        $region19: #{tpu_custom_call.1} parent=11 // pred_region
          _
        $region20: #{tpu_custom_call.1} parent=11 // pred_fallthru
          _
      $region12: #{tpu_custom_call.1} parent=5 // pred_fallthru
        _
      %p141 = scmp.lt.s32.totalorder %s16, 2
      // Predicated region
      $region21: #{tpu_custom_call.1} parent=5 // pred_check
        %p142 = pneg %p141
      $region22: #{tpu_custom_call.1} parent=5 // pred_check_branch
        %144 = sbr.rel (%p142) target = $region24
      $region23: #{tpu_custom_call.1} parent=5 // pred_region
        // Predicated region
        $region25: #{tpu_custom_call.1} parent=23 // pred_check
          %p145 = pneg %p36
        $region26: #{tpu_custom_call.1} parent=23 // pred_check_branch
          %147 = sbr.rel (%p145) target = $region28
        $region27: #{tpu_custom_call.1} parent=23 // pred_region
          %s148 = sand.u32 %s26, 1
          %s149 = scalar_lea.sflag [#allocation3], %s148
          %s150 = sand.u32 %s26, 1
          %s151 = smul.addr %s150, 128
          %s152 = scalar_lea.vmem [#allocation2], %s151
          %s153 = smul.u32 16, %s16
          %s155 = ssub.s32 2048, 2048
          %156 = vsyncadd %s149, %s155
          %s157 = smul.addr %s153, 128
          %s158 = scalar_lea.hbm %s0, %s157
          %s159 = sshll.u32 %s152, 4
          %s160 = int_to_ptr.vmem [resolvable:$true] %s159
          %165 = dma.hbm_to_vmem [thread:$0]  %s158, 2048, %s160, %s149, 128, 128, 8
        $region28: #{tpu_custom_call.1} parent=23 // pred_fallthru
          _
      $region24: #{tpu_custom_call.1} parent=5 // pred_fallthru
        _
      %p166 = scmp.le.s32.totalorder 1, %s16
      %p167 = scmp.lt.s32.totalorder %s16, 3
      %p168 = pnand %p166, %p167
      %p169 = pneg %p168
      // Predicated region
      $region29: #{tpu_custom_call.1} parent=5 // pred_check
        _
      $region30: #{tpu_custom_call.1} parent=5 // pred_check_branch
        %171 = sbr.rel (%p168) target = $region32
      $region31: #{tpu_custom_call.1} parent=5 // pred_region
        %s172 = ssub.s32 %s16, 1
        %s173 = sand.u32 %s29, 1
        %s174 = scalar_lea.sflag [#allocation3], %s173
        %s175 = sand.u32 %s29, 1
        %s176 = smul.addr %s175, 128
        %s177 = scalar_lea.vmem [#allocation2], %s176
        // Predicated region
        $region33: #{tpu_custom_call.1} parent=31 // pred_check
          %p178 = pneg %p42
        $region34: #{tpu_custom_call.1} parent=31 // pred_check_branch
          %180 = sbr.rel (%p178) target = $region36
        $region35: #{tpu_custom_call.1} parent=31 // pred_region
          %181 = dma.done %s174, 2048
        $region36: #{tpu_custom_call.1} parent=31 // pred_fallthru
          _
        // Predicated region
        $region37: #{tpu_custom_call.1} parent=31 // pred_check
          %p182 = pneg %p63
        $region38: #{tpu_custom_call.1} parent=31 // pred_check_branch
          %184 = sbr.rel (%p182) target = $region40
        $region39: #{tpu_custom_call.1} parent=31 // pred_region
          %185 = dma.done [#allocation6], 2048
        $region40: #{tpu_custom_call.1} parent=31 // pred_fallthru
          _
        %s186 = sand.u32 %s29, 1
        %s187 = scalar_lea.sflag [#allocation3], %s186
        %s188 = sand.u32 %s29, 1
        %s189 = smul.addr %s188, 128
        %s190 = scalar_lea.vmem [#allocation2], %s189
        %p191 = pneg %p42
        %p192 = pneg %p39
        %p193 = pneg %p63
        %p194 = pneg %p60
        %p195 = pneg %p84
        %p196 = pneg %p81
        %p197 = pneg %p110
        %p198 = pneg %p107
        %s199 = sand.u32 %s97, 1
        %s200 = scalar_lea.sflag [#allocation4], %s199
        %s201 = sand.u32 %s97, 1
        %s202 = smul.addr %s201, 128
        %s203 = scalar_lea.vmem [#allocation7], %s202
        %s204 = smul.u32 16, %s21
        %s205 = smul.u32 16, %s21
        %v207 = vld [vmem:[%s177] sm:$0xff]
        %v208 = vld [vmem:[%s177 + $0x8] sm:$0xff]
        %v209 = vld [vmem:[%s177 + $0x10] sm:$0xff]
        %v210 = vld [vmem:[%s177 + $0x18] sm:$0xff]
        %v211 = vld [vmem:[%s177 + $0x20] sm:$0xff]
        %v212 = vld [vmem:[%s177 + $0x28] sm:$0xff]
        %v213 = vld [vmem:[%s177 + $0x30] sm:$0xff]
        %v214 = vld [vmem:[%s177 + $0x38] sm:$0xff]
        %v215 = vld [vmem:[%s177 + $0x40] sm:$0xff]
        %v216 = vld [vmem:[%s177 + $0x48] sm:$0xff]
        %v217 = vld [vmem:[%s177 + $0x50] sm:$0xff]
        %v218 = vld [vmem:[%s177 + $0x58] sm:$0xff]
        %v219 = vld [vmem:[%s177 + $0x60] sm:$0xff]
        %v220 = vld [vmem:[%s177 + $0x68] sm:$0xff]
        %v221 = vld [vmem:[%s177 + $0x70] sm:$0xff]
        %v222 = vld [vmem:[%s177 + $0x78] sm:$0xff]
        %v223 = vpack.c.bf16 %v208, %v207
        %v224 = vpack.c.bf16 %v210, %v209
        %v225 = vpack.c.bf16 %v212, %v211
        %v226 = vpack.c.bf16 %v214, %v213
        %v227 = vpack.c.bf16 %v216, %v215
        %v228 = vpack.c.bf16 %v218, %v217
        %v229 = vpack.c.bf16 %v220, %v219
        %v230 = vpack.c.bf16 %v222, %v221
        %v231 = vld [vmem:[#allocation5] sm:$0xff]
        %v232 = vld [vmem:[#allocation5 + $0x8] sm:$0xff]
        %v233 = vld [vmem:[#allocation5 + $0x10] sm:$0xff]
        %v234 = vld [vmem:[#allocation5 + $0x18] sm:$0xff]
        %v235 = vld [vmem:[#allocation5 + $0x20] sm:$0xff]
        %v236 = vld [vmem:[#allocation5 + $0x28] sm:$0xff]
        %v237 = vld [vmem:[#allocation5 + $0x30] sm:$0xff]
        %v238 = vld [vmem:[#allocation5 + $0x38] sm:$0xff]
        %v239 = vld [vmem:[#allocation5 + $0x40] sm:$0xff]
        %v240 = vld [vmem:[#allocation5 + $0x48] sm:$0xff]
        %v241 = vld [vmem:[#allocation5 + $0x50] sm:$0xff]
        %v242 = vld [vmem:[#allocation5 + $0x58] sm:$0xff]
        %v243 = vld [vmem:[#allocation5 + $0x60] sm:$0xff]
        %v244 = vld [vmem:[#allocation5 + $0x68] sm:$0xff]
        %v245 = vld [vmem:[#allocation5 + $0x70] sm:$0xff]
        %v246 = vld [vmem:[#allocation5 + $0x78] sm:$0xff]
        %v247 = vld [vmem:[%s2] sm:$0x3]
        %v249 = vlaneseq
        %v250 = vshrl.u32 %v249, 7
        %v251 = vsub.s32 0, %v250
        %v252 = vrot.slane %v247, %v251
        %v253 = vlaneseq
        %v254 = vshrl.u32 %v253, 7
        %v255 = vsub.s32 1, %v254
        %v256 = vrot.slane %v247, %v255
        %v275 = vunpack.c.l.b16 %v231
        %v276 = vunpack.c.h.b16 %v231
        %v277 = vunpack.c.l.b16 %v232
        %v278 = vunpack.c.h.b16 %v232
        %v279 = vunpack.c.l.b16 %v233
        %v280 = vunpack.c.h.b16 %v233
        %v281 = vunpack.c.l.b16 %v234
        %v282 = vunpack.c.h.b16 %v234
        %v283 = vunpack.c.l.b16 %v235
        %v284 = vunpack.c.h.b16 %v235
        %v285 = vunpack.c.l.b16 %v236
        %v286 = vunpack.c.h.b16 %v236
        %v287 = vunpack.c.l.b16 %v237
        %v288 = vunpack.c.h.b16 %v237
        %v289 = vunpack.c.l.b16 %v238
        %v290 = vunpack.c.h.b16 %v238
        %v291 = vunpack.c.l.b16 %v239
        %v292 = vunpack.c.h.b16 %v239
        %v293 = vunpack.c.l.b16 %v240
        %v294 = vunpack.c.h.b16 %v240
        %v295 = vunpack.c.l.b16 %v241
        %v296 = vunpack.c.h.b16 %v241
        %v297 = vunpack.c.l.b16 %v242
        %v298 = vunpack.c.h.b16 %v242
        %v299 = vunpack.c.l.b16 %v243
        %v300 = vunpack.c.h.b16 %v243
        %v301 = vunpack.c.l.b16 %v244
        %v302 = vunpack.c.h.b16 %v244
        %v303 = vunpack.c.l.b16 %v245
        %v304 = vunpack.c.h.b16 %v245
        %v305 = vunpack.c.l.b16 %v246
        %v306 = vunpack.c.h.b16 %v246
        %v307 = vpack.c.b16 %v277, %v275
        %v308 = vpack.c.b16 %v278, %v276
        %v309 = vpack.c.b16 %v281, %v279
        %v310 = vpack.c.b16 %v282, %v280
        %v311 = vpack.c.b16 %v285, %v283
        %v312 = vpack.c.b16 %v286, %v284
        %v313 = vpack.c.b16 %v289, %v287
        %v314 = vpack.c.b16 %v290, %v288
        %v315 = vpack.c.b16 %v293, %v291
        %v316 = vpack.c.b16 %v294, %v292
        %v317 = vpack.c.b16 %v297, %v295
        %v318 = vpack.c.b16 %v298, %v296
        %v319 = vpack.c.b16 %v301, %v299
        %v320 = vpack.c.b16 %v302, %v300
        %v321 = vpack.c.b16 %v305, %v303
        %v322 = vpack.c.b16 %v306, %v304
        %339 = vmatprep.subr.bf16.mxu0 %v322
        %340 = vmatpush1.bf16.msra.mxu0 %v321
        %341 = vmatprep.subr.bf16.mxu0 %v320
        %342 = vmatpush1.bf16.msra.mxu0 %v319
        %343 = vmatprep.subr.bf16.mxu0 %v318
        %344 = vmatpush1.bf16.msra.mxu0 %v317
        %345 = vmatprep.subr.bf16.mxu0 %v316
        %346 = vmatpush1.bf16.msra.mxu0 %v315
        %347 = vmatprep.subr.bf16.mxu0 %v314
        %348 = vmatpush1.bf16.msra.mxu0 %v313
        %349 = vmatprep.subr.bf16.mxu0 %v312
        %350 = vmatpush1.bf16.msra.mxu0 %v311
        %351 = vmatprep.subr.bf16.mxu0 %v310
        %352 = vmatpush1.bf16.msra.mxu0 %v309
        %353 = vmatprep.subr.bf16.mxu0 %v308
        %354 = vmatpush1.bf16.msra.mxu0 %v307
        %355 = vmatprep.subr.bf16.mxu0 0
        %356 = vmatpush2.bf16.msra.mxu0 0
        %357 = vmatprep.subr.bf16.mxu0 0
        %358 = vmatpush2.bf16.msra.mxu0 0
        %359 = vmatprep.subr.bf16.mxu0 0
        %360 = vmatpush2.bf16.msra.mxu0 0
        %361 = vmatprep.subr.bf16.mxu0 0
        %362 = vmatpush2.bf16.msra.mxu0 0
        %363 = vmatprep.subr.bf16.mxu0 0
        %364 = vmatpush2.bf16.msra.mxu0 0
        %365 = vmatprep.subr.bf16.mxu0 0
        %366 = vmatpush2.bf16.msra.mxu0 0
        %367 = vmatprep.subr.bf16.mxu0 0
        %368 = vmatpush2.bf16.msra.mxu0 0
        %369 = vmatprep.subr.bf16.mxu0 0
        %370 = vmatpush2.bf16.msra.mxu0 0
        %371 = vmatprep.mubr.bf16.mxu0 0
        %372 = vmatmul.mubr.bf16.gmra.mxu0 %v223
        %v373 = vpop.f32.mrf.mxu0
        %v374 = vadd.f32 %v252, %v373
        %v375 = vpop.f32.mrf.mxu0
        %v376 = vadd.f32 %v256, %v375
        %v377 = vpop.f32.mrf.mxu0
        %v378 = vadd.f32 %v252, %v377
        %v379 = vpop.f32.mrf.mxu0
        %v380 = vadd.f32 %v256, %v379
        %381 = vmatprep.mubr.bf16.mxu0 0
        %382 = vmatmul.mubr.bf16.gmra.mxu0 %v224
        %v383 = vpop.f32.mrf.mxu0
        %v384 = vadd.f32 %v252, %v383
        %v385 = vpop.f32.mrf.mxu0
        %v386 = vadd.f32 %v256, %v385
        %v387 = vpop.f32.mrf.mxu0
        %v388 = vadd.f32 %v252, %v387
        %v389 = vpop.f32.mrf.mxu0
        %v390 = vadd.f32 %v256, %v389
        %391 = vmatprep.mubr.bf16.mxu0 0
        %392 = vmatmul.mubr.bf16.gmra.mxu0 %v225
        %v393 = vpop.f32.mrf.mxu0
        %v394 = vadd.f32 %v252, %v393
        %v395 = vpop.f32.mrf.mxu0
        %v396 = vadd.f32 %v256, %v395
        %v397 = vpop.f32.mrf.mxu0
        %v398 = vadd.f32 %v252, %v397
        %v399 = vpop.f32.mrf.mxu0
        %v400 = vadd.f32 %v256, %v399
        %401 = vmatprep.mubr.bf16.mxu0 0
        %402 = vmatmul.mubr.bf16.gmra.mxu0 %v226
        %v403 = vpop.f32.mrf.mxu0
        %v404 = vadd.f32 %v252, %v403
        %v405 = vpop.f32.mrf.mxu0
        %v406 = vadd.f32 %v256, %v405
        %v407 = vpop.f32.mrf.mxu0
        %v408 = vadd.f32 %v252, %v407
        %v409 = vpop.f32.mrf.mxu0
        %v410 = vadd.f32 %v256, %v409
        %411 = vmatprep.mubr.bf16.mxu0 0
        %412 = vmatmul.mubr.bf16.gmra.mxu0 %v227
        %v413 = vpop.f32.mrf.mxu0
        %v414 = vadd.f32 %v252, %v413
        %v415 = vpop.f32.mrf.mxu0
        %v416 = vadd.f32 %v256, %v415
        %v417 = vpop.f32.mrf.mxu0
        %v418 = vadd.f32 %v252, %v417
        %v419 = vpop.f32.mrf.mxu0
        %v420 = vadd.f32 %v256, %v419
        %421 = vmatprep.mubr.bf16.mxu0 0
        %422 = vmatmul.mubr.bf16.gmra.mxu0 %v228
        %v423 = vpop.f32.mrf.mxu0
        %v424 = vadd.f32 %v252, %v423
        %v425 = vpop.f32.mrf.mxu0
        %v426 = vadd.f32 %v256, %v425
        %v427 = vpop.f32.mrf.mxu0
        %v428 = vadd.f32 %v252, %v427
        %v429 = vpop.f32.mrf.mxu0
        %v430 = vadd.f32 %v256, %v429
        %431 = vmatprep.mubr.bf16.mxu0 0
        %432 = vmatmul.mubr.bf16.gmra.mxu0 %v229
        %v433 = vpop.f32.mrf.mxu0
        %v434 = vadd.f32 %v252, %v433
        %v435 = vpop.f32.mrf.mxu0
        %v436 = vadd.f32 %v256, %v435
        %v437 = vpop.f32.mrf.mxu0
        %v438 = vadd.f32 %v252, %v437
        %v439 = vpop.f32.mrf.mxu0
        %v440 = vadd.f32 %v256, %v439
        %441 = vmatprep.mubr.bf16.mxu0 0
        %442 = vmatmul.mubr.bf16.gmra.mxu0 %v230
        %v443 = vpop.f32.mrf.mxu0
        %v444 = vadd.f32 %v252, %v443
        %v445 = vpop.f32.mrf.mxu0
        %v446 = vadd.f32 %v256, %v445
        %v447 = vpop.f32.mrf.mxu0
        %v448 = vadd.f32 %v252, %v447
        %v449 = vpop.f32.mrf.mxu0
        %v450 = vadd.f32 %v256, %v449
        %451 = vdwg.mxu0
        %v452 = vpack.c.bf16 %v378, %v374
        %v453 = vpack.c.bf16 %v380, %v376
        %v454 = vpack.c.bf16 %v388, %v384
        %v455 = vpack.c.bf16 %v390, %v386
        %v456 = vpack.c.bf16 %v398, %v394
        %v457 = vpack.c.bf16 %v400, %v396
        %v458 = vpack.c.bf16 %v408, %v404
        %v459 = vpack.c.bf16 %v410, %v406
        %v460 = vpack.c.bf16 %v418, %v414
        %v461 = vpack.c.bf16 %v420, %v416
        %v462 = vpack.c.bf16 %v428, %v424
        %v463 = vpack.c.bf16 %v430, %v426
        %v464 = vpack.c.bf16 %v438, %v434
        %v465 = vpack.c.bf16 %v440, %v436
        %v466 = vpack.c.bf16 %v448, %v444
        %v467 = vpack.c.bf16 %v450, %v446
        %v484 = vunpack.c.l.b16 %v452
        %v485 = vunpack.c.l.b16 %v453
        %v486 = vunpack.c.h.b16 %v452
        %v487 = vunpack.c.h.b16 %v453
        %v488 = vunpack.c.l.b16 %v454
        %v489 = vunpack.c.l.b16 %v455
        %v490 = vunpack.c.h.b16 %v454
        %v491 = vunpack.c.h.b16 %v455
        %v492 = vunpack.c.l.b16 %v456
        %v493 = vunpack.c.l.b16 %v457
        %v494 = vunpack.c.h.b16 %v456
        %v495 = vunpack.c.h.b16 %v457
        %v496 = vunpack.c.l.b16 %v458
        %v497 = vunpack.c.l.b16 %v459
        %v498 = vunpack.c.h.b16 %v458
        %v499 = vunpack.c.h.b16 %v459
        %v500 = vunpack.c.l.b16 %v460
        %v501 = vunpack.c.l.b16 %v461
        %v502 = vunpack.c.h.b16 %v460
        %v503 = vunpack.c.h.b16 %v461
        %v504 = vunpack.c.l.b16 %v462
        %v505 = vunpack.c.l.b16 %v463
        %v506 = vunpack.c.h.b16 %v462
        %v507 = vunpack.c.h.b16 %v463
        %v508 = vunpack.c.l.b16 %v464
        %v509 = vunpack.c.l.b16 %v465
        %v510 = vunpack.c.h.b16 %v464
        %v511 = vunpack.c.h.b16 %v465
        %v512 = vunpack.c.l.b16 %v466
        %v513 = vunpack.c.l.b16 %v467
        %v514 = vunpack.c.h.b16 %v466
        %v515 = vunpack.c.h.b16 %v467
        %v516 = vpack.c.b16 %v485, %v484
        %v517 = vpack.c.b16 %v487, %v486
        %v518 = vpack.c.b16 %v489, %v488
        %v519 = vpack.c.b16 %v491, %v490
        %v520 = vpack.c.b16 %v493, %v492
        %v521 = vpack.c.b16 %v495, %v494
        %v522 = vpack.c.b16 %v497, %v496
        %v523 = vpack.c.b16 %v499, %v498
        %v524 = vpack.c.b16 %v501, %v500
        %v525 = vpack.c.b16 %v503, %v502
        %v526 = vpack.c.b16 %v505, %v504
        %v527 = vpack.c.b16 %v507, %v506
        %v528 = vpack.c.b16 %v509, %v508
        %v529 = vpack.c.b16 %v511, %v510
        %v530 = vpack.c.b16 %v513, %v512
        %v531 = vpack.c.b16 %v515, %v514
        %548 = vst [vmem:[%s203] sm:$0xff] %v516
        %549 = vst [vmem:[%s203 + $0x8] sm:$0xff] %v517
        %550 = vst [vmem:[%s203 + $0x10] sm:$0xff] %v518
        %551 = vst [vmem:[%s203 + $0x18] sm:$0xff] %v519
        %552 = vst [vmem:[%s203 + $0x20] sm:$0xff] %v520
        %553 = vst [vmem:[%s203 + $0x28] sm:$0xff] %v521
        %554 = vst [vmem:[%s203 + $0x30] sm:$0xff] %v522
        %555 = vst [vmem:[%s203 + $0x38] sm:$0xff] %v523
        %556 = vst [vmem:[%s203 + $0x40] sm:$0xff] %v524
        %557 = vst [vmem:[%s203 + $0x48] sm:$0xff] %v525
        %558 = vst [vmem:[%s203 + $0x50] sm:$0xff] %v526
        %559 = vst [vmem:[%s203 + $0x58] sm:$0xff] %v527
        %560 = vst [vmem:[%s203 + $0x60] sm:$0xff] %v528
        %561 = vst [vmem:[%s203 + $0x68] sm:$0xff] %v529
        %562 = vst [vmem:[%s203 + $0x70] sm:$0xff] %v530
        %563 = vst [vmem:[%s203 + $0x78] sm:$0xff] %v531
        %s564 = sand.u32 %s97, 1
        %s565 = scalar_lea.sflag [#allocation4], %s564
        %s566 = sand.u32 %s97, 1
        %s567 = smul.addr %s566, 128
        %s568 = scalar_lea.vmem [#allocation7], %s567
        // Predicated region
        $region41: #{tpu_custom_call.1} parent=31 // pred_check
          %p569 = pneg %p107
        $region42: #{tpu_custom_call.1} parent=31 // pred_check_branch
          %571 = sbr.rel (%p569) target = $region44
        $region43: #{tpu_custom_call.1} parent=31 // pred_region
          %s572 = smul.u32 16, %s21
          %s574 = ssub.s32 2048, 2048
          %575 = vsyncadd %s565, %s574
          %s576 = smul.addr %s572, 2
          %s577 = smul.addr %s576, 64
          %s578 = scalar_lea.hbm %s3, %s577
          %s579 = sshll.u32 %s568, 4
          %s580 = int_to_ptr.vmem [resolvable:$true] %s579
          %585 = dma.vmem_to_hbm [thread:$0]  %s580, 2048, %s578, %s565, 128, 128, 8
        $region44: #{tpu_custom_call.1} parent=31 // pred_fallthru
          _
      $region32: #{tpu_custom_call.1} parent=5 // pred_fallthru
        _
      %p586 = scmp.le.s32.totalorder 2, %s16
      // Predicated region
      $region45: #{tpu_custom_call.1} parent=5 // pred_check
        %p587 = pneg %p586
      $region46: #{tpu_custom_call.1} parent=5 // pred_check_branch
        %589 = sbr.rel (%p587) target = $region48
      $region47: #{tpu_custom_call.1} parent=5 // pred_region
        %s590 = ssub.s32 %s16, 2
        // Predicated region
        $region49: #{tpu_custom_call.1} parent=47 // pred_check
          %p591 = pneg %p113
        $region50: #{tpu_custom_call.1} parent=47 // pred_check_branch
          %593 = sbr.rel (%p591) target = $region52
        $region51: #{tpu_custom_call.1} parent=47 // pred_region
          %s594 = sand.u32 %s98, 1
          %s595 = scalar_lea.sflag [#allocation4], %s594
          %s596 = sand.u32 %s98, 1
          %s597 = smul.addr %s596, 128
          %s598 = scalar_lea.vmem [#allocation7], %s597
          %599 = dma.done %s595, 2048
        $region52: #{tpu_custom_call.1} parent=47 // pred_fallthru
          _
      $region48: #{tpu_custom_call.1} parent=5 // pred_fallthru
        _
    $region6: #{tpu_custom_call.1} parent=1 // loop_footer
      %s20 = sadd.s32 1, %s16
    $region7: #{tpu_custom_call.1} parent=1 // loop_footer_branch
      %15 = sbr.rel target = $region3
    $region8: #{tpu_custom_call.1} parent=1 // loop_exit
      _
    %600 = vsyncpa [#allocation3], 1
    %s601 = scalar_lea.sflag [#allocation3], 1
    %602 = vsyncpa %s601, 1
    %603 = vsyncpa [#allocation6], 1
    %604 = vsyncpa [#allocation4], 1
    %s605 = scalar_lea.sflag [#allocation4], 1
    %606 = vsyncpa %s605, 1

</llo_original>
